<compile_context>
chip_gen: v6e
topology: v6e:2x2x1
jax: 0.10.0
libtpu: 0.0.40
codegen_flags: <defaults>
</compile_context>

<pallas_src>
import functools

import jax
import jax.numpy as jnp
from jax.experimental import pallas as pl
from jax.experimental.pallas import tpu as pltpu

# Network configuration (same semantics as PINN.__init__ with these layers).
LAYERS = [2, 32, 32, 32, 1]        # 4 linear layers, tanh between them
ACTIVATION = jnp.tanh


def _pinn_kernel(x_ref, *refs):
    """Fused MLP forward for one batch tile, batch on the lane axis.

    x_ref:  [f_in, bn]
    refs = (w0, b0, w1, b1, ..., w_last, b_last, out_ref)
      layer 0 / hidden layers:  w_i [out_i, in_i],  b_i [out_i, 1]
      last layer (out==1):      w_last [in_last, 1], b_last [1, 1]  (pre-transposed)
    out_ref: [f_out, bn]
    """
    out_ref = refs[-1]
    p = refs[:-1]
    n_layers = len(p) // 2
    f_in = x_ref.shape[0]

    # ---- layer 0: K = f_in is tiny (2) -> VPU outer product, skip the MXU ----
    w0 = p[0][...]                                   # [h0, f_in]
    b0 = p[1][...]                                   # [h0, 1]
    if f_in <= 8:
        h = b0 + w0[:, 0:1] * x_ref[0:1, :]          # [h0,1]*[1,bn] -> [h0,bn]
        for k in range(1, f_in):
            h = h + w0[:, k:k + 1] * x_ref[k:k + 1, :]
    else:
        h = jnp.dot(w0, x_ref[...], preferred_element_type=jnp.float32) + b0
    h = ACTIVATION(h)

    # ---- hidden layers: 32x32 MXU matmuls, batch stays on the lane axis ----
    for li in range(1, n_layers - 1):
        w = p[2 * li][...]                           # [out, in]
        b = p[2 * li + 1][...]                       # [out, 1]
        h = ACTIVATION(jnp.dot(w, h, preferred_element_type=jnp.float32) + b)

    # ---- last layer ----
    w_l = p[-2][...]
    b_l = p[-1][...]
    if w_l.shape[1] == 1 and w_l.shape[0] == h.shape[0]:
        # out_features == 1: VPU multiply + sublane (XLU) reduce -> lane-dense [1, bn]
        out = jnp.sum(w_l * h, axis=0, keepdims=True) + b_l
    else:
        out = jnp.dot(w_l, h, preferred_element_type=jnp.float32) + b_l
    out_ref[...] = out.astype(out_ref.dtype)


def _round_up(v: int, m: int) -> int:
    return -(-v // m) * m


@functools.partial(jax.jit, static_argnames=("block_n", "features_first"))
def pinn_forward(x, params, *, block_n=4096, features_first=False):
    """Run the fused PINN MLP.

    x: [N, f_in] (PyTorch layout) or, if features_first=True, [f_in, N]
       (avoids the one wrapper-side transpose HBM pass).
    params: flat tuple in PyTorch nn.Linear layout (w0, b0, w1, b1, ...),
            wi: [out_i, in_i], bi: [out_i].
    Returns [N, f_out].
    """
    n_layers = len(params) // 2
    assert n_layers >= 2, "expect at least two linear layers"
    f_out = params[-2].shape[0]

    # ---------------- layout plumbing (outside the kernel) ----------------
    if features_first:
        f_in, n = x.shape
        xt = x                                        # already [f_in, N]
    else:
        n, f_in = x.shape
        xt = x.T                                      # [f_in, N]; pass features-first
                                                      # data to skip this HBM pass.
    assert f_in == params[0].shape[1]

    kparams = []
    for li in range(n_layers):
        w, b = params[2 * li], params[2 * li + 1]
        if li == n_layers - 1 and f_out == 1:
            kparams.append(w.T)                       # [in_last, 1]
        else:
            kparams.append(w)                         # [out, in]
        kparams.append(b.reshape(-1, 1))              # [out, 1]

    # ---------------- lane-tile selection ----------------
    bn = _round_up(max(128, min(int(block_n), 32768)), 128)
    if n >= 1024:
        # Keep >=2 tiles so v7x can shard the (parallel) batch axis across both TCs.
        bn = min(bn, _round_up(-(-n // 2), 128))
    else:
        bn = min(bn, _round_up(n, 128))
    grid = (pl.cdiv(n, bn),)                          # ragged N: last tile is masked

    # ---------------- compiler params ----------------
    # Rough per-step VMEM: double-buffered, sublane-padded in/out tiles
    # (2 * [8,bn] + 2 * [8,bn] f32) + ~6 live [32,bn] f32 intermediates + params.
    est_vmem = bn * 4 * (8 * 2 + 8 * 2 + 32 * 6) + (1 << 20)
    cp_kwargs = dict(dimension_semantics=("parallel",))
    if est_vmem > 12 * 1024 * 1024:
        # Only needed for very large bn; v5e's default scoped limit is 16 MiB.
        cp_kwargs["vmem_limit_bytes"] = int(
            min(60 * 1024 * 1024, max(2 * est_vmem, 32 * 1024 * 1024)))
    compiler_params = pltpu.CompilerParams(**cp_kwargs)

    # ---------------- block specs ----------------
    in_specs = [pl.BlockSpec((f_in, bn), lambda i: (0, i))]
    for kp in kparams:
        # Constant index_map -> params stay VMEM-resident across grid steps.
        in_specs.append(pl.BlockSpec(kp.shape, lambda i: (0, 0)))
    out_spec = pl.BlockSpec((f_out, bn), lambda i: (0, i))

    out_t = pl.pallas_call(
        _pinn_kernel,
        out_shape=jax.ShapeDtypeStruct((f_out, n), jnp.float32),
        grid_spec=pltpu.PrefetchScalarGridSpec(
            num_scalar_prefetch=0,
            grid=grid,
            in_specs=in_specs,
            out_specs=out_spec,
        ),
        compiler_params=compiler_params,
    )(xt, *kparams)

    if f_out == 1:
        # [1, N] and [N, 1] share the same row-major order -> free reshape,
        # no extra HBM transpose pass.
        return out_t.reshape(n, 1)
    return out_t.T


def init_params(key, layers):
    """Deterministic init mimicking torch.nn.Linear (uniform +/- 1/sqrt(fan_in)).

    Weights kept in PyTorch layout [out, in]; biases [out].
    """
    params = []
    for i in range(len(layers) - 1):
        fan_in, fan_out = layers[i], layers[i + 1]
        key, kw, kb = jax.random.split(key, 3)
        bound = 1.0 / jnp.sqrt(jnp.asarray(fan_in, jnp.float32))
        w = jax.random.uniform(kw, (fan_out, fan_in), jnp.float32,
                               minval=-bound, maxval=bound)
        b = jax.random.uniform(kb, (fan_out,), jnp.float32,
                               minval=-bound, maxval=bound)
        params.extend([w, b])
    return tuple(params)


def pinn_reference(x, params):
    """Pure-JAX reference of the same forward pass (sanity check)."""
    h = x
    n_layers = len(params) // 2
    for li in range(n_layers):
        w, b = params[2 * li], params[2 * li + 1]
        h = h @ w.T + b
        if li != n_layers - 1:
            h = ACTIVATION(h)
    return h


if __name__ == "__main__":
    key = jax.random.PRNGKey(0)
    key, kx = jax.random.split(key)

    # Small, deliberately ragged collocation batch: exercises the masked final
    # tile and a 2-step grid (so v7x can shard tiles across both TensorCores).
    N = 1200
    x = jax.random.normal(kx, (N, LAYERS[0]), jnp.float32)
    params = init_params(key, LAYERS)

    out = jax.block_until_ready(pinn_forward(x, params))
    ref = pinn_reference(x, params)

    assert out.shape == (N, LAYERS[-1])
    assert jnp.allclose(out, ref, atol=1e-4, rtol=1e-4), "mismatch vs reference"

    # TODO(synk): ff=True (GaussianEncoding / random Fourier features) and
    # hard_constraint_fn are optional, off-by-default branches and are not used
    # in this configuration.
    print("KERNEL_OK")
</pallas_src>

<mosaic_0001>
module attributes {stable_mosaic.version = 11 : i64} {
  func.func @_pinn_kernel(%arg0: i32, %arg1: memref<2x640xf32, #tpu.memory_space<vmem>>, %arg2: memref<32x2xf32, #tpu.memory_space<vmem>>, %arg3: memref<32x1xf32, #tpu.memory_space<vmem>>, %arg4: memref<32x32xf32, #tpu.memory_space<vmem>>, %arg5: memref<32x1xf32, #tpu.memory_space<vmem>>, %arg6: memref<32x32xf32, #tpu.memory_space<vmem>>, %arg7: memref<32x1xf32, #tpu.memory_space<vmem>>, %arg8: memref<32x1xf32, #tpu.memory_space<vmem>>, %arg9: memref<1x1xf32, #tpu.memory_space<vmem>>, %arg10: memref<1x640xf32, #tpu.memory_space<vmem>>) attributes {dimension_semantics = [#tpu.dimension_semantics<parallel>], iteration_bounds = array<i64: 2>, scalar_prefetch = 0 : i64, scratch_operands = 0 : i64, tpu.core_type = #tpu.core_type<tc>, window_params = [{transform_indices = @transform_0, window_bounds = array<i64: 2, 640>}, {pipeline_mode = #tpu.pipeline_mode<synchronous>, transform_indices = @transform_1, window_bounds = array<i64: 32, 2>}, {pipeline_mode = #tpu.pipeline_mode<synchronous>, transform_indices = @transform_2, window_bounds = array<i64: 32, 1>}, {pipeline_mode = #tpu.pipeline_mode<synchronous>, transform_indices = @transform_3, window_bounds = array<i64: 32, 32>}, {pipeline_mode = #tpu.pipeline_mode<synchronous>, transform_indices = @transform_4, window_bounds = array<i64: 32, 1>}, {pipeline_mode = #tpu.pipeline_mode<synchronous>, transform_indices = @transform_5, window_bounds = array<i64: 32, 32>}, {pipeline_mode = #tpu.pipeline_mode<synchronous>, transform_indices = @transform_6, window_bounds = array<i64: 32, 1>}, {pipeline_mode = #tpu.pipeline_mode<synchronous>, transform_indices = @transform_7, window_bounds = array<i64: 32, 1>}, {pipeline_mode = #tpu.pipeline_mode<synchronous>, transform_indices = @transform_8, window_bounds = array<i64: 1, 1>}, {transform_indices = @transform_9, window_bounds = array<i64: 1, 640>}]} {
    %c0 = arith.constant 0 : index
    %c0_0 = arith.constant 0 : index
    %0 = vector.load %arg2[%c0, %c0_0] : memref<32x2xf32, #tpu.memory_space<vmem>>, vector<32x2xf32>
    %c0_1 = arith.constant 0 : index
    %c0_2 = arith.constant 0 : index
    %1 = vector.load %arg3[%c0_1, %c0_2] : memref<32x1xf32, #tpu.memory_space<vmem>>, vector<32x1xf32>
    %2 = vector.extract_strided_slice %0 {offsets = [0, 0], sizes = [32, 1], strides = [1, 1]} : vector<32x2xf32> to vector<32x1xf32>
    %c0_3 = arith.constant 0 : index
    %c0_4 = arith.constant 0 : index
    %3 = vector.load %arg1[%c0_3, %c0_4] : memref<2x640xf32, #tpu.memory_space<vmem>>, vector<1x640xf32>
    %4 = vector.broadcast %2 : vector<32x1xf32> to vector<32x640xf32>
    %5 = vector.broadcast %3 : vector<1x640xf32> to vector<32x640xf32>
    %6 = arith.mulf %4, %5 : vector<32x640xf32>
    %7 = vector.broadcast %1 : vector<32x1xf32> to vector<32x640xf32>
    %8 = arith.addf %7, %6 : vector<32x640xf32>
    %9 = vector.extract_strided_slice %0 {offsets = [0, 1], sizes = [32, 1], strides = [1, 1]} : vector<32x2xf32> to vector<32x1xf32>
    %c1 = arith.constant 1 : index
    %c0_5 = arith.constant 0 : index
    %10 = vector.load %arg1[%c1, %c0_5] : memref<2x640xf32, #tpu.memory_space<vmem>>, vector<1x640xf32>
    %11 = vector.broadcast %9 : vector<32x1xf32> to vector<32x640xf32>
    %12 = vector.broadcast %10 : vector<1x640xf32> to vector<32x640xf32>
    %13 = arith.mulf %11, %12 : vector<32x640xf32>
    %14 = arith.addf %8, %13 : vector<32x640xf32>
    %15 = math.tanh %14 : vector<32x640xf32>
    %c0_6 = arith.constant 0 : index
    %c0_7 = arith.constant 0 : index
    %16 = vector.load %arg4[%c0_6, %c0_7] : memref<32x32xf32, #tpu.memory_space<vmem>>, vector<32x32xf32>
    %c0_8 = arith.constant 0 : index
    %c0_9 = arith.constant 0 : index
    %17 = vector.load %arg5[%c0_8, %c0_9] : memref<32x1xf32, #tpu.memory_space<vmem>>, vector<32x1xf32>
    %cst = arith.constant dense<0.000000e+00> : vector<32x640xf32>
    %18 = tpu.matmul %16, %15, %cst {dimension_numbers = #tpu.dot_dimension_numbers<[1], [0], [0], [1], [0, 0, 1, 1], [], []>} : vector<32x32xf32>, vector<32x640xf32>, vector<32x640xf32> -> vector<32x640xf32>
    %19 = vector.broadcast %17 : vector<32x1xf32> to vector<32x640xf32>
    %20 = arith.addf %18, %19 : vector<32x640xf32>
    %21 = math.tanh %20 : vector<32x640xf32>
    %c0_10 = arith.constant 0 : index
    %c0_11 = arith.constant 0 : index
    %22 = vector.load %arg6[%c0_10, %c0_11] : memref<32x32xf32, #tpu.memory_space<vmem>>, vector<32x32xf32>
    %c0_12 = arith.constant 0 : index
    %c0_13 = arith.constant 0 : index
    %23 = vector.load %arg7[%c0_12, %c0_13] : memref<32x1xf32, #tpu.memory_space<vmem>>, vector<32x1xf32>
    %cst_14 = arith.constant dense<0.000000e+00> : vector<32x640xf32>
    %24 = tpu.matmul %22, %21, %cst_14 {dimension_numbers = #tpu.dot_dimension_numbers<[1], [0], [0], [1], [0, 0, 1, 1], [], []>} : vector<32x32xf32>, vector<32x640xf32>, vector<32x640xf32> -> vector<32x640xf32>
    %25 = vector.broadcast %23 : vector<32x1xf32> to vector<32x640xf32>
    %26 = arith.addf %24, %25 : vector<32x640xf32>
    %27 = math.tanh %26 : vector<32x640xf32>
    %c0_15 = arith.constant 0 : index
    %c0_16 = arith.constant 0 : index
    %28 = vector.load %arg8[%c0_15, %c0_16] : memref<32x1xf32, #tpu.memory_space<vmem>>, vector<32x1xf32>
    %c0_17 = arith.constant 0 : index
    %c0_18 = arith.constant 0 : index
    %29 = vector.load %arg9[%c0_17, %c0_18] : memref<1x1xf32, #tpu.memory_space<vmem>>, vector<1x1xf32>
    %30 = vector.broadcast %28 : vector<32x1xf32> to vector<32x640xf32>
    %31 = arith.mulf %30, %27 : vector<32x640xf32>
    %cst_19 = arith.constant dense<0.000000e+00> : vector<640xf32>
    %32 = vector.multi_reduction <add>, %31, %cst_19 [0] : vector<32x640xf32> to vector<640xf32>
    %33 = vector.shape_cast %32 : vector<640xf32> to vector<1x640xf32>
    %34 = vector.broadcast %29 : vector<1x1xf32> to vector<1x640xf32>
    %35 = arith.addf %33, %34 : vector<1x640xf32>
    %c0_20 = arith.constant 0 : index
    %c0_21 = arith.constant 0 : index
    %36 = vector.load %arg10[%c0_20, %c0_21] : memref<1x640xf32, #tpu.memory_space<vmem>>, vector<1x640xf32>
    tpu.vector_store %arg10[%c0_20, %c0_21], %35 {strides = array<i32>} : memref<1x640xf32, #tpu.memory_space<vmem>>, vector<1x640xf32>,
    return
  }
  func.func @transform_0(%arg0: i32) -> (i32, i32) {
    %c0_i32 = arith.constant 0 : i32
    %c0_i32_0 = arith.constant 0 : i32
    return %c0_i32, %arg0 : i32, i32
  }
  func.func @transform_1(%arg0: i32) -> (i32, i32) {
    %c0_i32 = arith.constant 0 : i32
    %c0_i32_0 = arith.constant 0 : i32
    %c0_i32_1 = arith.constant 0 : i32
    return %c0_i32, %c0_i32_0 : i32, i32
  }
  func.func @transform_2(%arg0: i32) -> (i32, i32) {
    %c0_i32 = arith.constant 0 : i32
    %c0_i32_0 = arith.constant 0 : i32
    %c0_i32_1 = arith.constant 0 : i32
    return %c0_i32, %c0_i32_0 : i32, i32
  }
  func.func @transform_3(%arg0: i32) -> (i32, i32) {
    %c0_i32 = arith.constant 0 : i32
    %c0_i32_0 = arith.constant 0 : i32
    %c0_i32_1 = arith.constant 0 : i32
    return %c0_i32, %c0_i32_0 : i32, i32
  }
  func.func @transform_4(%arg0: i32) -> (i32, i32) {
    %c0_i32 = arith.constant 0 : i32
    %c0_i32_0 = arith.constant 0 : i32
    %c0_i32_1 = arith.constant 0 : i32
    return %c0_i32, %c0_i32_0 : i32, i32
  }
  func.func @transform_5(%arg0: i32) -> (i32, i32) {
    %c0_i32 = arith.constant 0 : i32
    %c0_i32_0 = arith.constant 0 : i32
    %c0_i32_1 = arith.constant 0 : i32
    return %c0_i32, %c0_i32_0 : i32, i32
  }
  func.func @transform_6(%arg0: i32) -> (i32, i32) {
    %c0_i32 = arith.constant 0 : i32
    %c0_i32_0 = arith.constant 0 : i32
    %c0_i32_1 = arith.constant 0 : i32
    return %c0_i32, %c0_i32_0 : i32, i32
  }
  func.func @transform_7(%arg0: i32) -> (i32, i32) {
    %c0_i32 = arith.constant 0 : i32
    %c0_i32_0 = arith.constant 0 : i32
    %c0_i32_1 = arith.constant 0 : i32
    return %c0_i32, %c0_i32_0 : i32, i32
  }
  func.func @transform_8(%arg0: i32) -> (i32, i32) {
    %c0_i32 = arith.constant 0 : i32
    %c0_i32_0 = arith.constant 0 : i32
    %c0_i32_1 = arith.constant 0 : i32
    return %c0_i32, %c0_i32_0 : i32, i32
  }
  func.func @transform_9(%arg0: i32) -> (i32, i32) {
    %c0_i32 = arith.constant 0 : i32
    %c0_i32_0 = arith.constant 0 : i32
    return %c0_i32, %arg0 : i32, i32
  }
}

</mosaic_0001>

<llo_original>
// kernel: pinn_forward.1
$region0: #{pinn_forward.1}
  #allocation0 [shape = 'u32[]', space=smem, size = 0x4, offset = 0x4, fixed_abs, tag = 'smem constant byte address 0x4 - core index']
  #allocation1 [shape = 'u32[144,128]{1,0:T(1,128)}', space=vmem, size = 0x12000, scoped, tag = 'internal scratch']
  #allocation2 [shape = 'f32[1,1]{1,0:T(1,128)S(1)}', space=vmem, size = 0x200, scoped, tag = 'scoped memory for pinn_forward.1']
  %s0 = inlined_call_operand.vmem [shape: f32[2,1200], index: 0, kind: input, shape index: {}]
  %s1 = inlined_call_operand.vmem [shape: f32[32,2], index: 1, kind: input, shape index: {}]
  %s2 = inlined_call_operand.vmem [shape: f32[32,1], index: 2, kind: input, shape index: {}]
  %s3 = inlined_call_operand.vmem [shape: f32[32,32], index: 3, kind: input, shape index: {}]
  %s4 = inlined_call_operand.vmem [shape: f32[32,1], index: 4, kind: input, shape index: {}]
  %s5 = inlined_call_operand.vmem [shape: f32[32,32], index: 5, kind: input, shape index: {}]
  %s6 = inlined_call_operand.vmem [shape: f32[32,1], index: 6, kind: input, shape index: {}]
  %s7 = inlined_call_operand.vmem [shape: f32[32,1], index: 7, kind: input, shape index: {}]
  %s8 = inlined_call_operand.<no memory space> [shape: f32[1,1], index: 8, kind: input, shape index: {}]
  %s9 = inlined_call_operand.hbm [shape: f32[1,1200], index: 9, kind: output, shape index: {}]
  %s10 = sld [smem:[#allocation0]]
  $region69: #{pinn_forward.1} parent=0
    _
  %s12 = ssub.s32 1, %s10
  %s13 = scalar_select 0, %s12, %s10
  %v14 = vstv %s8
  %15 = vst [vmem:[#allocation2] sm:$0x1] %v14
  $region1: #{pinn_forward.1} parent=0
    #allocation3 [shape = 'u8[5120]{0}', space=vmem, size = 0x1400, scoped, tag = 'output window, operand 0']
    #allocation4 [shape = 's32[2]{0}', space=sflag, size = 0x8, scoped, tag = 'scoped memory for pinn_forward.1']
    %16 = vsyncpa [#allocation4], 0
    %s17 = scalar_lea.sflag [#allocation4], 1
    %18 = vsyncpa %s17, 0
    loop: start=0, step=1, limit=4
    $region2: #{pinn_forward.1} parent=1 // loop_pre_header
      _
    $region3: #{pinn_forward.1} parent=1 // loop_header
      %s20 = sphi 0, %s24
      %p21 = scmp.ge.s32.totalorder %s20, 4
      %s30 = sphi 0, %s32
      %s33 = sphi 0, %s30
      %s34 = sphi 0, %s33
      %s50 = sphi 0, %s34
      %s54 = sphi 0, %s54
      %s56 = sphi 0, %s54
      %s57 = sphi 0, %s56
      %s71 = sphi 0, %s57
      %s75 = sphi 0, %s75
      %s77 = sphi 0, %s75
      %s78 = sphi 0, %s77
      %s92 = sphi 0, %s78
      %s96 = sphi 0, %s96
      %s98 = sphi 0, %s96
      %s99 = sphi 0, %s98
      %s113 = sphi 0, %s99
      %s117 = sphi 0, %s117
      %s119 = sphi 0, %s117
      %s120 = sphi 0, %s119
      %s134 = sphi 0, %s120
      %s138 = sphi 0, %s138
      %s140 = sphi 0, %s138
      %s141 = sphi 0, %s140
      %s155 = sphi 0, %s141
      %s159 = sphi 0, %s159
      %s161 = sphi 0, %s159
      %s162 = sphi 0, %s161
      %s176 = sphi 0, %s162
      %s180 = sphi 0, %s180
      %s182 = sphi 0, %s180
      %s183 = sphi 0, %s182
      %s197 = sphi 0, %s183
      %s201 = sphi 0, %s201
      %s203 = sphi 0, %s201
      %s204 = sphi 0, %s203
      %s218 = sphi 0, %s204
      %s224 = sphi 0, %s226
      %s227 = sphi 0, %s224
      %s228 = sphi 0, %s227
      %s244 = sphi 0, %s228
    $region4: #{pinn_forward.1} parent=1 // loop_header_branch
      %23 = sbr.rel (%p21) target = $region8
    $region5: #{pinn_forward.1} parent=1 // loop_body
      %s25 = ssub.s32 %s20, 1
      %s26 = ssub.s32 %s20, 2
      %s27 = sadd.s32 %s20, 1
      %s28 = ssub.s32 %s20, %s27
      %p29 = scmp.eq.s32.totalorder %s28, 0
      %s31 = sadd.s32 %s30, 1
      %s32 = scalar_select %p29, %s30, %s31
      %p35 = pneg %p29
      %p36 = scmp.eq.s32.totalorder %s20, 1
      %p37 = por %p35, %p36
      %p38 = scmp.ne.s32.totalorder %s30, %s33
      %p39 = scmp.eq.s32.totalorder %s20, 0
      %p40 = por %p38, %p39
      %p41 = scmp.ne.s32.totalorder %s30, %s33
      %p42 = scmp.eq.s32.totalorder %s25, 1
      %p43 = por %p41, %p42
      %p44 = scmp.ne.s32.totalorder %s33, %s34
      %p45 = scmp.eq.s32.totalorder %s25, 0
      %p46 = por %p44, %p45
      %p47 = scmp.ne.s32.totalorder %s33, %s34
      %p48 = scmp.eq.s32.totalorder %s26, 1
      %p49 = por %p47, %p48
      %p51 = scmp.ne.s32.totalorder %s34, %s50
      %p52 = scmp.eq.s32.totalorder %s26, 0
      %p53 = por %p51, %p52
      %s55 = sadd.s32 %s54, 1
      %p58 = scmp.eq.s32.totalorder %s20, 1
      %p59 = scmp.ne.s32.totalorder %s54, %s56
      %p60 = scmp.eq.s32.totalorder %s20, 0
      %p61 = por %p59, %p60
      %p62 = scmp.ne.s32.totalorder %s54, %s56
      %p63 = scmp.eq.s32.totalorder %s25, 1
      %p64 = por %p62, %p63
      %p65 = scmp.ne.s32.totalorder %s56, %s57
      %p66 = scmp.eq.s32.totalorder %s25, 0
      %p67 = por %p65, %p66
      %p68 = scmp.ne.s32.totalorder %s56, %s57
      %p69 = scmp.eq.s32.totalorder %s26, 1
      %p70 = por %p68, %p69
      %p72 = scmp.ne.s32.totalorder %s57, %s71
      %p73 = scmp.eq.s32.totalorder %s26, 0
      %p74 = por %p72, %p73
      %s76 = sadd.s32 %s75, 1
      %p79 = scmp.eq.s32.totalorder %s20, 1
      %p80 = scmp.ne.s32.totalorder %s75, %s77
      %p81 = scmp.eq.s32.totalorder %s20, 0
      %p82 = por %p80, %p81
      %p83 = scmp.ne.s32.totalorder %s75, %s77
      %p84 = scmp.eq.s32.totalorder %s25, 1
      %p85 = por %p83, %p84
      %p86 = scmp.ne.s32.totalorder %s77, %s78
      %p87 = scmp.eq.s32.totalorder %s25, 0
      %p88 = por %p86, %p87
      %p89 = scmp.ne.s32.totalorder %s77, %s78
      %p90 = scmp.eq.s32.totalorder %s26, 1
      %p91 = por %p89, %p90
      %p93 = scmp.ne.s32.totalorder %s78, %s92
      %p94 = scmp.eq.s32.totalorder %s26, 0
      %p95 = por %p93, %p94
      %s97 = sadd.s32 %s96, 1
      %p100 = scmp.eq.s32.totalorder %s20, 1
      %p101 = scmp.ne.s32.totalorder %s96, %s98
      %p102 = scmp.eq.s32.totalorder %s20, 0
      %p103 = por %p101, %p102
      %p104 = scmp.ne.s32.totalorder %s96, %s98
      %p105 = scmp.eq.s32.totalorder %s25, 1
      %p106 = por %p104, %p105
      %p107 = scmp.ne.s32.totalorder %s98, %s99
      %p108 = scmp.eq.s32.totalorder %s25, 0
      %p109 = por %p107, %p108
      %p110 = scmp.ne.s32.totalorder %s98, %s99
      %p111 = scmp.eq.s32.totalorder %s26, 1
      %p112 = por %p110, %p111
      %p114 = scmp.ne.s32.totalorder %s99, %s113
      %p115 = scmp.eq.s32.totalorder %s26, 0
      %p116 = por %p114, %p115
      %s118 = sadd.s32 %s117, 1
      %p121 = scmp.eq.s32.totalorder %s20, 1
      %p122 = scmp.ne.s32.totalorder %s117, %s119
      %p123 = scmp.eq.s32.totalorder %s20, 0
      %p124 = por %p122, %p123
      %p125 = scmp.ne.s32.totalorder %s117, %s119
      %p126 = scmp.eq.s32.totalorder %s25, 1
      %p127 = por %p125, %p126
      %p128 = scmp.ne.s32.totalorder %s119, %s120
      %p129 = scmp.eq.s32.totalorder %s25, 0
      %p130 = por %p128, %p129
      %p131 = scmp.ne.s32.totalorder %s119, %s120
      %p132 = scmp.eq.s32.totalorder %s26, 1
      %p133 = por %p131, %p132
      %p135 = scmp.ne.s32.totalorder %s120, %s134
      %p136 = scmp.eq.s32.totalorder %s26, 0
      %p137 = por %p135, %p136
      %s139 = sadd.s32 %s138, 1
      %p142 = scmp.eq.s32.totalorder %s20, 1
      %p143 = scmp.ne.s32.totalorder %s138, %s140
      %p144 = scmp.eq.s32.totalorder %s20, 0
      %p145 = por %p143, %p144
      %p146 = scmp.ne.s32.totalorder %s138, %s140
      %p147 = scmp.eq.s32.totalorder %s25, 1
      %p148 = por %p146, %p147
      %p149 = scmp.ne.s32.totalorder %s140, %s141
      %p150 = scmp.eq.s32.totalorder %s25, 0
      %p151 = por %p149, %p150
      %p152 = scmp.ne.s32.totalorder %s140, %s141
      %p153 = scmp.eq.s32.totalorder %s26, 1
      %p154 = por %p152, %p153
      %p156 = scmp.ne.s32.totalorder %s141, %s155
      %p157 = scmp.eq.s32.totalorder %s26, 0
      %p158 = por %p156, %p157
      %s160 = sadd.s32 %s159, 1
      %p163 = scmp.eq.s32.totalorder %s20, 1
      %p164 = scmp.ne.s32.totalorder %s159, %s161
      %p165 = scmp.eq.s32.totalorder %s20, 0
      %p166 = por %p164, %p165
      %p167 = scmp.ne.s32.totalorder %s159, %s161
      %p168 = scmp.eq.s32.totalorder %s25, 1
      %p169 = por %p167, %p168
      %p170 = scmp.ne.s32.totalorder %s161, %s162
      %p171 = scmp.eq.s32.totalorder %s25, 0
      %p172 = por %p170, %p171
      %p173 = scmp.ne.s32.totalorder %s161, %s162
      %p174 = scmp.eq.s32.totalorder %s26, 1
      %p175 = por %p173, %p174
      %p177 = scmp.ne.s32.totalorder %s162, %s176
      %p178 = scmp.eq.s32.totalorder %s26, 0
      %p179 = por %p177, %p178
      %s181 = sadd.s32 %s180, 1
      %p184 = scmp.eq.s32.totalorder %s20, 1
      %p185 = scmp.ne.s32.totalorder %s180, %s182
      %p186 = scmp.eq.s32.totalorder %s20, 0
      %p187 = por %p185, %p186
      %p188 = scmp.ne.s32.totalorder %s180, %s182
      %p189 = scmp.eq.s32.totalorder %s25, 1
      %p190 = por %p188, %p189
      %p191 = scmp.ne.s32.totalorder %s182, %s183
      %p192 = scmp.eq.s32.totalorder %s25, 0
      %p193 = por %p191, %p192
      %p194 = scmp.ne.s32.totalorder %s182, %s183
      %p195 = scmp.eq.s32.totalorder %s26, 1
      %p196 = por %p194, %p195
      %p198 = scmp.ne.s32.totalorder %s183, %s197
      %p199 = scmp.eq.s32.totalorder %s26, 0
      %p200 = por %p198, %p199
      %s202 = sadd.s32 %s201, 1
      %p205 = scmp.eq.s32.totalorder %s20, 1
      %p206 = scmp.ne.s32.totalorder %s201, %s203
      %p207 = scmp.eq.s32.totalorder %s20, 0
      %p208 = por %p206, %p207
      %p209 = scmp.ne.s32.totalorder %s201, %s203
      %p210 = scmp.eq.s32.totalorder %s25, 1
      %p211 = por %p209, %p210
      %p212 = scmp.ne.s32.totalorder %s203, %s204
      %p213 = scmp.eq.s32.totalorder %s25, 0
      %p214 = por %p212, %p213
      %p215 = scmp.ne.s32.totalorder %s203, %s204
      %p216 = scmp.eq.s32.totalorder %s26, 1
      %p217 = por %p215, %p216
      %p219 = scmp.ne.s32.totalorder %s204, %s218
      %p220 = scmp.eq.s32.totalorder %s26, 0
      %p221 = por %p219, %p220
      %s222 = ssub.s32 %s20, %s27
      %p223 = scmp.eq.s32.totalorder %s222, 0
      %s225 = sadd.s32 %s224, 1
      %s226 = scalar_select %p223, %s224, %s225
      %p229 = pneg %p223
      %p230 = scmp.eq.s32.totalorder %s20, 1
      %p231 = por %p229, %p230
      %p232 = scmp.ne.s32.totalorder %s224, %s227
      %p233 = scmp.eq.s32.totalorder %s20, 0
      %p234 = por %p232, %p233
      %p235 = scmp.ne.s32.totalorder %s224, %s227
      %p236 = scmp.eq.s32.totalorder %s25, 1
      %p237 = por %p235, %p236
      %p238 = scmp.ne.s32.totalorder %s227, %s228
      %p239 = scmp.eq.s32.totalorder %s25, 0
      %p240 = por %p238, %p239
      %p241 = scmp.ne.s32.totalorder %s227, %s228
      %p242 = scmp.eq.s32.totalorder %s26, 1
      %p243 = por %p241, %p242
      %p245 = scmp.ne.s32.totalorder %s228, %s244
      %p246 = scmp.eq.s32.totalorder %s26, 0
      %p247 = por %p245, %p246
      %p248 = scmp.le.s32.totalorder 1, %s20
      %p249 = scmp.lt.s32.totalorder %s20, 3
      %p250 = pnand %p248, %p249
      %p251 = pneg %p250
      // Predicated region
      $region9: #{pinn_forward.1} parent=5 // pred_check
        _
      $region10: #{pinn_forward.1} parent=5 // pred_check_branch
        %253 = sbr.rel (%p250) target = $region12
      $region11: #{pinn_forward.1} parent=5 // pred_region
        %s254 = ssub.s32 %s20, 1
        // Predicated region
        $region13: #{pinn_forward.1} parent=11 // pred_check
          %p255 = pneg %p67
        $region14: #{pinn_forward.1} parent=11 // pred_check_branch
          %257 = sbr.rel (%p255) target = $region16
        $region15: #{pinn_forward.1} parent=11 // pred_region
          _
        $region16: #{pinn_forward.1} parent=11 // pred_fallthru
          _
        // Predicated region
        $region17: #{pinn_forward.1} parent=11 // pred_check
          %p258 = pneg %p88
        $region18: #{pinn_forward.1} parent=11 // pred_check_branch
          %260 = sbr.rel (%p258) target = $region20
        $region19: #{pinn_forward.1} parent=11 // pred_region
          _
        $region20: #{pinn_forward.1} parent=11 // pred_fallthru
          _
        // Predicated region
        $region21: #{pinn_forward.1} parent=11 // pred_check
          %p261 = pneg %p109
        $region22: #{pinn_forward.1} parent=11 // pred_check_branch
          %263 = sbr.rel (%p261) target = $region24
        $region23: #{pinn_forward.1} parent=11 // pred_region
          _
        $region24: #{pinn_forward.1} parent=11 // pred_fallthru
          _
        // Predicated region
        $region25: #{pinn_forward.1} parent=11 // pred_check
          %p264 = pneg %p130
        $region26: #{pinn_forward.1} parent=11 // pred_check_branch
          %266 = sbr.rel (%p264) target = $region28
        $region27: #{pinn_forward.1} parent=11 // pred_region
          _
        $region28: #{pinn_forward.1} parent=11 // pred_fallthru
          _
        // Predicated region
        $region29: #{pinn_forward.1} parent=11 // pred_check
          %p267 = pneg %p151
        $region30: #{pinn_forward.1} parent=11 // pred_check_branch
          %269 = sbr.rel (%p267) target = $region32
        $region31: #{pinn_forward.1} parent=11 // pred_region
          _
        $region32: #{pinn_forward.1} parent=11 // pred_fallthru
          _
        // Predicated region
        $region33: #{pinn_forward.1} parent=11 // pred_check
          %p270 = pneg %p172
        $region34: #{pinn_forward.1} parent=11 // pred_check_branch
          %272 = sbr.rel (%p270) target = $region36
        $region35: #{pinn_forward.1} parent=11 // pred_region
          _
        $region36: #{pinn_forward.1} parent=11 // pred_fallthru
          _
        // Predicated region
        $region37: #{pinn_forward.1} parent=11 // pred_check
          %p273 = pneg %p193
        $region38: #{pinn_forward.1} parent=11 // pred_check_branch
          %275 = sbr.rel (%p273) target = $region40
        $region39: #{pinn_forward.1} parent=11 // pred_region
          _
        $region40: #{pinn_forward.1} parent=11 // pred_fallthru
          _
        // Predicated region
        $region41: #{pinn_forward.1} parent=11 // pred_check
          %p276 = pneg %p214
        $region42: #{pinn_forward.1} parent=11 // pred_check_branch
          %278 = sbr.rel (%p276) target = $region44
        $region43: #{pinn_forward.1} parent=11 // pred_region
          _
        $region44: #{pinn_forward.1} parent=11 // pred_fallthru
          _
      $region12: #{pinn_forward.1} parent=5 // pred_fallthru
        _
      %p279 = scmp.lt.s32.totalorder %s20, 2
      // Predicated region
      $region45: #{pinn_forward.1} parent=5 // pred_check
        %p280 = pneg %p279
      $region46: #{pinn_forward.1} parent=5 // pred_check_branch
        %282 = sbr.rel (%p280) target = $region48
      $region47: #{pinn_forward.1} parent=5 // pred_region
        // Predicated region
        $region49: #{pinn_forward.1} parent=47 // pred_check
          %p283 = pneg %p40
        $region50: #{pinn_forward.1} parent=47 // pred_check_branch
          %285 = sbr.rel (%p283) target = $region52
        $region51: #{pinn_forward.1} parent=47 // pred_region
          %s286 = smul.u32 5, %s20
          %p287 = scmp.lt.s32.totalorder %s286, 9
          %s288 = scalar_select %p287, %s286, 9
          %s289 = smul.addr %s288, 2
          %s290 = scalar_lea.vmem %s0, %s289
          %s291 = smul.u32 5, %s20
        $region52: #{pinn_forward.1} parent=47 // pred_fallthru
          _
      $region48: #{pinn_forward.1} parent=5 // pred_fallthru
        _
      %p292 = scmp.le.s32.totalorder 1, %s20
      %p293 = scmp.lt.s32.totalorder %s20, 3
      %p294 = pnand %p292, %p293
      %p295 = pneg %p294
      // Predicated region
      $region53: #{pinn_forward.1} parent=5 // pred_check
        _
      $region54: #{pinn_forward.1} parent=5 // pred_check_branch
        %297 = sbr.rel (%p294) target = $region56
      $region55: #{pinn_forward.1} parent=5 // pred_region
        %s298 = ssub.s32 %s20, 1
        %s299 = smul.u32 5, %s25
        %p300 = scmp.lt.s32.totalorder %s299, 9
        %s301 = scalar_select %p300, %s299, 9
        %s302 = smul.addr %s301, 2
        %s303 = scalar_lea.vmem %s0, %s302
        %p304 = pneg %p46
        %p305 = pneg %p43
        %p306 = pneg %p67
        %p307 = pneg %p64
        %p308 = pneg %p88
        %p309 = pneg %p85
        %p310 = pneg %p109
        %p311 = pneg %p106
        %p312 = pneg %p130
        %p313 = pneg %p127
        %p314 = pneg %p151
        %p315 = pneg %p148
        %p316 = pneg %p172
        %p317 = pneg %p169
        %p318 = pneg %p193
        %p319 = pneg %p190
        %p320 = pneg %p214
        %p321 = pneg %p211
        %p322 = pneg %p240
        %p323 = pneg %p237
        %s324 = sand.u32 %s227, 1
        %s325 = scalar_lea.sflag [#allocation4], %s324
        %s326 = sand.u32 %s227, 1
        %s327 = smul.addr %s326, 5
        %s328 = scalar_lea.vmem [#allocation3], %s327
        %s329 = smul.u32 5, %s25
        %p330 = scmp.lt.s32.totalorder %s329, 9
        %s331 = scalar_select %p330, %s329, 9
        %s332 = smul.addr %s331, 2
        %s333 = scalar_lea.vmem %s0, %s332
        %s334 = smul.u32 5, %s25
        %s335 = smul.u32 5, %s25
        %v336 = vld [vmem:[%s1] sm:$0xff]
        %v337 = vld [vmem:[%s1 + $0x8] sm:$0xff]
        %v338 = vld [vmem:[%s1 + $0x10] sm:$0xff]
        %v339 = vld [vmem:[%s1 + $0x18] sm:$0xff]
        %v340 = vld [vmem:[%s2] sm:$0xff]
        %v341 = vld [vmem:[%s2 + $0x8] sm:$0xff]
        %v342 = vld [vmem:[%s2 + $0x10] sm:$0xff]
        %v343 = vld [vmem:[%s2 + $0x18] sm:$0xff]
        %v344 = vld [vmem:[%s333] ss:$2 sm:$0x1f]
        %346 = vset.pattern.permute.xlu0 0
        %347 = vperm.xlu0 %346, %v336
        %v348 = vpop.permute.xlu0 %347
        %351 = vset.pattern.permute.xlu0 0
        %352 = vperm.xlu0 %351, %v337
        %v353 = vpop.permute.xlu0 %352
        %356 = vset.pattern.permute.xlu0 0
        %357 = vperm.xlu0 %356, %v338
        %v358 = vpop.permute.xlu0 %357
        %361 = vset.pattern.permute.xlu0 0
        %362 = vperm.xlu0 %361, %v339
        %v363 = vpop.permute.xlu0 %362
        %v366 = vlaneseq
        %v367 = vshrl.u32 %v366, 7
        %v368 = vsub.s32 0, %v367
        %v369 = vrot.slane %v344, %v368
        %v370 = vlaneseq
        %v371 = vshrl.u32 %v370, 7
        %v372 = vsub.s32 1, %v371
        %v373 = vrot.slane %v344, %v372
        %v374 = vlaneseq
        %v375 = vshrl.u32 %v374, 7
        %v376 = vsub.s32 2, %v375
        %v377 = vrot.slane %v344, %v376
        %v378 = vlaneseq
        %v379 = vshrl.u32 %v378, 7
        %v380 = vsub.s32 3, %v379
        %v381 = vrot.slane %v344, %v380
        %v382 = vlaneseq
        %v383 = vshrl.u32 %v382, 7
        %v384 = vsub.s32 4, %v383
        %v385 = vrot.slane %v344, %v384
        %v391 = vmul.f32 %v348, %v369
        %v392 = vmul.f32 %v348, %v373
        %v393 = vmul.f32 %v348, %v377
        %v394 = vmul.f32 %v348, %v381
        %v395 = vmul.f32 %v348, %v385
        %v396 = vmul.f32 %v353, %v369
        %v397 = vmul.f32 %v353, %v373
        %v398 = vmul.f32 %v353, %v377
        %v399 = vmul.f32 %v353, %v381
        %v400 = vmul.f32 %v353, %v385
        %v401 = vmul.f32 %v358, %v369
        %v402 = vmul.f32 %v358, %v373
        %v403 = vmul.f32 %v358, %v377
        %v404 = vmul.f32 %v358, %v381
        %v405 = vmul.f32 %v358, %v385
        %v406 = vmul.f32 %v363, %v369
        %v407 = vmul.f32 %v363, %v373
        %v408 = vmul.f32 %v363, %v377
        %v409 = vmul.f32 %v363, %v381
        %v410 = vmul.f32 %v363, %v385
        %412 = vset.pattern.permute.xlu0 0
        %413 = vperm.xlu0 %412, %v340
        %v414 = vpop.permute.xlu0 %413
        %417 = vset.pattern.permute.xlu0 0
        %418 = vperm.xlu0 %417, %v341
        %v419 = vpop.permute.xlu0 %418
        %422 = vset.pattern.permute.xlu0 0
        %423 = vperm.xlu0 %422, %v342
        %v424 = vpop.permute.xlu0 %423
        %427 = vset.pattern.permute.xlu0 0
        %428 = vperm.xlu0 %427, %v343
        %v429 = vpop.permute.xlu0 %428
        %v431 = vadd.f32 %v414, %v391
        %v432 = vadd.f32 %v414, %v392
        %v433 = vadd.f32 %v414, %v393
        %v434 = vadd.f32 %v414, %v394
        %v435 = vadd.f32 %v414, %v395
        %v436 = vadd.f32 %v419, %v396
        %v437 = vadd.f32 %v419, %v397
        %v438 = vadd.f32 %v419, %v398
        %v439 = vadd.f32 %v419, %v399
        %v440 = vadd.f32 %v419, %v400
        %v441 = vadd.f32 %v424, %v401
        %v442 = vadd.f32 %v424, %v402
        %v443 = vadd.f32 %v424, %v403
        %v444 = vadd.f32 %v424, %v404
        %v445 = vadd.f32 %v424, %v405
        %v446 = vadd.f32 %v429, %v406
        %v447 = vadd.f32 %v429, %v407
        %v448 = vadd.f32 %v429, %v408
        %v449 = vadd.f32 %v429, %v409
        %v450 = vadd.f32 %v429, %v410
        %s451 = scalar_lea.vmem %s333, 1
        %v452 = vld [vmem:[%s451] ss:$2 sm:$0x1f]
        %453 = vset.pattern.permute.xlu0 1
        %454 = vperm.xlu0 %453, %v336
        %v455 = vpop.permute.xlu0 %454
        %457 = vset.pattern.permute.xlu0 1
        %458 = vperm.xlu0 %457, %v337
        %v459 = vpop.permute.xlu0 %458
        %461 = vset.pattern.permute.xlu0 1
        %462 = vperm.xlu0 %461, %v338
        %v463 = vpop.permute.xlu0 %462
        %465 = vset.pattern.permute.xlu0 1
        %466 = vperm.xlu0 %465, %v339
        %v467 = vpop.permute.xlu0 %466
        %v470 = vlaneseq
        %v471 = vshrl.u32 %v470, 7
        %v472 = vsub.s32 0, %v471
        %v473 = vrot.slane %v452, %v472
        %v474 = vlaneseq
        %v475 = vshrl.u32 %v474, 7
        %v476 = vsub.s32 1, %v475
        %v477 = vrot.slane %v452, %v476
        %v478 = vlaneseq
        %v479 = vshrl.u32 %v478, 7
        %v480 = vsub.s32 2, %v479
        %v481 = vrot.slane %v452, %v480
        %v482 = vlaneseq
        %v483 = vshrl.u32 %v482, 7
        %v484 = vsub.s32 3, %v483
        %v485 = vrot.slane %v452, %v484
        %v486 = vlaneseq
        %v487 = vshrl.u32 %v486, 7
        %v488 = vsub.s32 4, %v487
        %v489 = vrot.slane %v452, %v488
        %v495 = vmul.f32 %v455, %v473
        %v496 = vmul.f32 %v455, %v477
        %v497 = vmul.f32 %v455, %v481
        %v498 = vmul.f32 %v455, %v485
        %v499 = vmul.f32 %v455, %v489
        %v500 = vmul.f32 %v459, %v473
        %v501 = vmul.f32 %v459, %v477
        %v502 = vmul.f32 %v459, %v481
        %v503 = vmul.f32 %v459, %v485
        %v504 = vmul.f32 %v459, %v489
        %v505 = vmul.f32 %v463, %v473
        %v506 = vmul.f32 %v463, %v477
        %v507 = vmul.f32 %v463, %v481
        %v508 = vmul.f32 %v463, %v485
        %v509 = vmul.f32 %v463, %v489
        %v510 = vmul.f32 %v467, %v473
        %v511 = vmul.f32 %v467, %v477
        %v512 = vmul.f32 %v467, %v481
        %v513 = vmul.f32 %v467, %v485
        %v514 = vmul.f32 %v467, %v489
        %v515 = vadd.f32 %v431, %v495
        %v516 = vadd.f32 %v432, %v496
        %v517 = vadd.f32 %v433, %v497
        %v518 = vadd.f32 %v434, %v498
        %v519 = vadd.f32 %v435, %v499
        %v520 = vadd.f32 %v436, %v500
        %v521 = vadd.f32 %v437, %v501
        %v522 = vadd.f32 %v438, %v502
        %v523 = vadd.f32 %v439, %v503
        %v524 = vadd.f32 %v440, %v504
        %v525 = vadd.f32 %v441, %v505
        %v526 = vadd.f32 %v442, %v506
        %v527 = vadd.f32 %v443, %v507
        %v528 = vadd.f32 %v444, %v508
        %v529 = vadd.f32 %v445, %v509
        %v530 = vadd.f32 %v446, %v510
        %v531 = vadd.f32 %v447, %v511
        %v532 = vadd.f32 %v448, %v512
        %v533 = vadd.f32 %v449, %v513
        %v534 = vadd.f32 %v450, %v514
        %v535 = vtanh.pop %v515
        %v536 = vtanh.pop %v516
        %v537 = vtanh.pop %v517
        %v538 = vtanh.pop %v518
        %v539 = vtanh.pop %v519
        %v540 = vtanh.pop %v520
        %v541 = vtanh.pop %v521
        %v542 = vtanh.pop %v522
        %v543 = vtanh.pop %v523
        %v544 = vtanh.pop %v524
        %v545 = vtanh.pop %v525
        %v546 = vtanh.pop %v526
        %v547 = vtanh.pop %v527
        %v548 = vtanh.pop %v528
        %v549 = vtanh.pop %v529
        %v550 = vtanh.pop %v530
        %v551 = vtanh.pop %v531
        %v552 = vtanh.pop %v532
        %v553 = vtanh.pop %v533
        %v554 = vtanh.pop %v534
        %v555 = vld [vmem:[%s3] sm:$0xff]
        %v556 = vld [vmem:[%s3 + $0x8] sm:$0xff]
        %v557 = vld [vmem:[%s3 + $0x10] sm:$0xff]
        %v558 = vld [vmem:[%s3 + $0x18] sm:$0xff]
        %v559 = vld [vmem:[%s4] sm:$0xff]
        %v560 = vld [vmem:[%s4 + $0x8] sm:$0xff]
        %v561 = vld [vmem:[%s4 + $0x10] sm:$0xff]
        %v562 = vld [vmem:[%s4 + $0x18] sm:$0xff]
        %564 = vset.pattern.permute.xlu0 0
        %565 = vperm.xlu0 %564, %v559
        %v566 = vpop.permute.xlu0 %565
        %569 = vset.pattern.permute.xlu0 0
        %570 = vperm.xlu0 %569, %v560
        %v571 = vpop.permute.xlu0 %570
        %574 = vset.pattern.permute.xlu0 0
        %575 = vperm.xlu0 %574, %v561
        %v576 = vpop.permute.xlu0 %575
        %579 = vset.pattern.permute.xlu0 0
        %580 = vperm.xlu0 %579, %v562
        %v581 = vpop.permute.xlu0 %580
        %vm583 = vcmask 261120
        %v585 = vsel %vm583, %v555, 0
        %v588 = vsel %vm583, %v556, 0
        %v591 = vsel %vm583, %v557, 0
        %v594 = vsel %vm583, %v558, 0
        %596 = vmatprep.subr.mxu0 0.0
        %597 = vmatpush1.msra.mxu0 0.0
        %598 = vmatprep.subr.mxu0 0.0
        %599 = vmatpush1.msra.mxu0 0.0
        %600 = vmatprep.subr.mxu0 0.0
        %601 = vmatpush1.msra.mxu0 0.0
        %602 = vmatprep.subr.mxu0 0.0
        %603 = vmatpush1.msra.mxu0 0.0
        %604 = vmatprep.subr.mxu0 0.0
        %605 = vmatpush1.msra.mxu0 0.0
        %606 = vmatprep.subr.mxu0 0.0
        %607 = vmatpush1.msra.mxu0 0.0
        %608 = vmatprep.subr.mxu0 0.0
        %609 = vmatpush1.msra.mxu0 0.0
        %610 = vmatprep.subr.mxu0 0.0
        %611 = vmatpush1.msra.mxu0 0.0
        %612 = vmatprep.subr.mxu0 0.0
        %613 = vmatpush1.msra.mxu0 0.0
        %614 = vmatprep.subr.mxu0 0.0
        %615 = vmatpush1.msra.mxu0 0.0
        %616 = vmatprep.subr.mxu0 0.0
        %617 = vmatpush1.msra.mxu0 0.0
        %618 = vmatprep.subr.mxu0 0.0
        %619 = vmatpush1.msra.mxu0 0.0
        %620 = vmatprep.subr.mxu0 %v551
        %621 = vmatpush1.msra.mxu0 %v550
        %622 = vmatprep.subr.mxu0 %v546
        %623 = vmatpush1.msra.mxu0 %v545
        %624 = vmatprep.subr.mxu0 %v541
        %625 = vmatpush1.msra.mxu0 %v540
        %626 = vmatprep.subr.mxu0 %v536
        %627 = vmatpush1.msra.mxu0 %v535
        %628 = vmatprep.subr.mxu0 0.0
        %629 = vmatpush2.msra.mxu0 0.0
        %630 = vmatprep.subr.mxu0 0.0
        %631 = vmatpush2.msra.mxu0 0.0
        %632 = vmatprep.subr.mxu0 0.0
        %633 = vmatpush2.msra.mxu0 0.0
        %634 = vmatprep.subr.mxu0 0.0
        %635 = vmatpush2.msra.mxu0 0.0
        %636 = vmatprep.subr.mxu0 0.0
        %637 = vmatpush2.msra.mxu0 0.0
        %638 = vmatprep.subr.mxu0 0.0
        %639 = vmatpush2.msra.mxu0 0.0
        %640 = vmatprep.subr.mxu0 0.0
        %641 = vmatpush2.msra.mxu0 0.0
        %642 = vmatprep.subr.mxu0 0.0
        %643 = vmatpush2.msra.mxu0 0.0
        %644 = vmatprep.subr.mxu0 0.0
        %645 = vmatpush2.msra.mxu0 0.0
        %646 = vmatprep.subr.mxu0 0.0
        %647 = vmatpush2.msra.mxu0 0.0
        %648 = vmatprep.subr.mxu0 0.0
        %649 = vmatpush2.msra.mxu0 0.0
        %650 = vmatprep.subr.mxu0 0.0
        %651 = vmatpush2.msra.mxu0 0.0
        %652 = vmatprep.subr.mxu0 0.0
        %653 = vmatpush2.msra.mxu0 0.0
        %654 = vmatprep.subr.mxu0 0.0
        %655 = vmatpush2.msra.mxu0 0.0
        %656 = vmatprep.subr.mxu0 0.0
        %657 = vmatpush2.msra.mxu0 0.0
        %658 = vmatprep.subr.mxu0 0.0
        %659 = vmatpush2.msra.mxu0 0.0
        %660 = vmatprep.mubr.f32.mxu0 0.0
        %661 = vmatmul.mubr.f32.gmra.mxu0 %v585
        %v662 = vpop.f32.mrf.mxu0
        %v663 = vadd.f32 %v566, %v662
        %v664 = vpop.f32.mrf.mxu0
        %v665 = vadd.f32 %v566, %v664
        %666 = vmatprep.mubr.f32.mxu0 0.0
        %667 = vmatmul.mubr.f32.gmra.mxu0 %v588
        %v668 = vpop.f32.mrf.mxu0
        %v669 = vadd.f32 %v571, %v668
        %v670 = vpop.f32.mrf.mxu0
        %v671 = vadd.f32 %v571, %v670
        %672 = vmatprep.mubr.f32.mxu0 0.0
        %673 = vmatmul.mubr.f32.gmra.mxu0 %v591
        %v674 = vpop.f32.mrf.mxu0
        %v675 = vadd.f32 %v576, %v674
        %v676 = vpop.f32.mrf.mxu0
        %v677 = vadd.f32 %v576, %v676
        %678 = vmatprep.mubr.f32.mxu0 0.0
        %679 = vmatmul.mubr.f32.gmra.mxu0 %v594
        %v680 = vpop.f32.mrf.mxu0
        %v681 = vadd.f32 %v581, %v680
        %v682 = vpop.f32.mrf.mxu0
        %v683 = vadd.f32 %v581, %v682
        %684 = vdwg.mxu0
        %685 = vmatprep.subr.mxu0 0.0
        %686 = vmatpush1.msra.mxu0 0.0
        %687 = vmatprep.subr.mxu0 0.0
        %688 = vmatpush1.msra.mxu0 0.0
        %689 = vmatprep.subr.mxu0 0.0
        %690 = vmatpush1.msra.mxu0 0.0
        %691 = vmatprep.subr.mxu0 0.0
        %692 = vmatpush1.msra.mxu0 0.0
        %693 = vmatprep.subr.mxu0 0.0
        %694 = vmatpush1.msra.mxu0 0.0
        %695 = vmatprep.subr.mxu0 0.0
        %696 = vmatpush1.msra.mxu0 0.0
        %697 = vmatprep.subr.mxu0 0.0
        %698 = vmatpush1.msra.mxu0 0.0
        %699 = vmatprep.subr.mxu0 0.0
        %700 = vmatpush1.msra.mxu0 0.0
        %701 = vmatprep.subr.mxu0 0.0
        %702 = vmatpush1.msra.mxu0 0.0
        %703 = vmatprep.subr.mxu0 0.0
        %704 = vmatpush1.msra.mxu0 0.0
        %705 = vmatprep.subr.mxu0 0.0
        %706 = vmatpush1.msra.mxu0 0.0
        %707 = vmatprep.subr.mxu0 0.0
        %708 = vmatpush1.msra.mxu0 0.0
        %709 = vmatprep.subr.mxu0 %v553
        %710 = vmatpush1.msra.mxu0 %v552
        %711 = vmatprep.subr.mxu0 %v548
        %712 = vmatpush1.msra.mxu0 %v547
        %713 = vmatprep.subr.mxu0 %v543
        %714 = vmatpush1.msra.mxu0 %v542
        %715 = vmatprep.subr.mxu0 %v538
        %716 = vmatpush1.msra.mxu0 %v537
        %717 = vmatprep.subr.mxu0 0.0
        %718 = vmatpush2.msra.mxu0 0.0
        %719 = vmatprep.subr.mxu0 0.0
        %720 = vmatpush2.msra.mxu0 0.0
        %721 = vmatprep.subr.mxu0 0.0
        %722 = vmatpush2.msra.mxu0 0.0
        %723 = vmatprep.subr.mxu0 0.0
        %724 = vmatpush2.msra.mxu0 0.0
        %725 = vmatprep.subr.mxu0 0.0
        %726 = vmatpush2.msra.mxu0 0.0
        %727 = vmatprep.subr.mxu0 0.0
        %728 = vmatpush2.msra.mxu0 0.0
        %729 = vmatprep.subr.mxu0 0.0
        %730 = vmatpush2.msra.mxu0 0.0
        %731 = vmatprep.subr.mxu0 0.0
        %732 = vmatpush2.msra.mxu0 0.0
        %733 = vmatprep.subr.mxu0 0.0
        %734 = vmatpush2.msra.mxu0 0.0
        %735 = vmatprep.subr.mxu0 0.0
        %736 = vmatpush2.msra.mxu0 0.0
        %737 = vmatprep.subr.mxu0 0.0
        %738 = vmatpush2.msra.mxu0 0.0
        %739 = vmatprep.subr.mxu0 0.0
        %740 = vmatpush2.msra.mxu0 0.0
        %741 = vmatprep.subr.mxu0 0.0
        %742 = vmatpush2.msra.mxu0 0.0
        %743 = vmatprep.subr.mxu0 0.0
        %744 = vmatpush2.msra.mxu0 0.0
        %745 = vmatprep.subr.mxu0 0.0
        %746 = vmatpush2.msra.mxu0 0.0
        %747 = vmatprep.subr.mxu0 0.0
        %748 = vmatpush2.msra.mxu0 0.0
        %749 = vmatprep.mubr.f32.mxu0 0.0
        %750 = vmatmul.mubr.f32.gmra.mxu0 %v585
        %v751 = vpop.f32.mrf.mxu0
        %v752 = vadd.f32 %v566, %v751
        %v753 = vpop.f32.mrf.mxu0
        %v754 = vadd.f32 %v566, %v753
        %755 = vmatprep.mubr.f32.mxu0 0.0
        %756 = vmatmul.mubr.f32.gmra.mxu0 %v588
        %v757 = vpop.f32.mrf.mxu0
        %v758 = vadd.f32 %v571, %v757
        %v759 = vpop.f32.mrf.mxu0
        %v760 = vadd.f32 %v571, %v759
        %761 = vmatprep.mubr.f32.mxu0 0.0
        %762 = vmatmul.mubr.f32.gmra.mxu0 %v591
        %v763 = vpop.f32.mrf.mxu0
        %v764 = vadd.f32 %v576, %v763
        %v765 = vpop.f32.mrf.mxu0
        %v766 = vadd.f32 %v576, %v765
        %767 = vmatprep.mubr.f32.mxu0 0.0
        %768 = vmatmul.mubr.f32.gmra.mxu0 %v594
        %v769 = vpop.f32.mrf.mxu0
        %v770 = vadd.f32 %v581, %v769
        %v771 = vpop.f32.mrf.mxu0
        %v772 = vadd.f32 %v581, %v771
        %773 = vdwg.mxu0
        %774 = vmatprep.subr.mxu0 0.0
        %775 = vmatpush1.msra.mxu0 0.0
        %776 = vmatprep.subr.mxu0 0.0
        %777 = vmatpush1.msra.mxu0 0.0
        %778 = vmatprep.subr.mxu0 0.0
        %779 = vmatpush1.msra.mxu0 0.0
        %780 = vmatprep.subr.mxu0 0.0
        %781 = vmatpush1.msra.mxu0 0.0
        %782 = vmatprep.subr.mxu0 0.0
        %783 = vmatpush1.msra.mxu0 0.0
        %784 = vmatprep.subr.mxu0 0.0
        %785 = vmatpush1.msra.mxu0 0.0
        %786 = vmatprep.subr.mxu0 0.0
        %787 = vmatpush1.msra.mxu0 0.0
        %788 = vmatprep.subr.mxu0 0.0
        %789 = vmatpush1.msra.mxu0 0.0
        %790 = vmatprep.subr.mxu0 0.0
        %791 = vmatpush1.msra.mxu0 0.0
        %792 = vmatprep.subr.mxu0 0.0
        %793 = vmatpush1.msra.mxu0 0.0
        %794 = vmatprep.subr.mxu0 0.0
        %795 = vmatpush1.msra.mxu0 0.0
        %796 = vmatprep.subr.mxu0 0.0
        %797 = vmatpush1.msra.mxu0 0.0
        %798 = vmatprep.subr.mxu0 0.0
        %799 = vmatpush1.msra.mxu0 %v554
        %800 = vmatprep.subr.mxu0 0.0
        %801 = vmatpush1.msra.mxu0 %v549
        %802 = vmatprep.subr.mxu0 0.0
        %803 = vmatpush1.msra.mxu0 %v544
        %804 = vmatprep.subr.mxu0 0.0
        %805 = vmatpush1.msra.mxu0 %v539
        %806 = vmatprep.subr.mxu0 0.0
        %807 = vmatpush2.msra.mxu0 0.0
        %808 = vmatprep.subr.mxu0 0.0
        %809 = vmatpush2.msra.mxu0 0.0
        %810 = vmatprep.subr.mxu0 0.0
        %811 = vmatpush2.msra.mxu0 0.0
        %812 = vmatprep.subr.mxu0 0.0
        %813 = vmatpush2.msra.mxu0 0.0
        %814 = vmatprep.subr.mxu0 0.0
        %815 = vmatpush2.msra.mxu0 0.0
        %816 = vmatprep.subr.mxu0 0.0
        %817 = vmatpush2.msra.mxu0 0.0
        %818 = vmatprep.subr.mxu0 0.0
        %819 = vmatpush2.msra.mxu0 0.0
        %820 = vmatprep.subr.mxu0 0.0
        %821 = vmatpush2.msra.mxu0 0.0
        %822 = vmatprep.subr.mxu0 0.0
        %823 = vmatpush2.msra.mxu0 0.0
        %824 = vmatprep.subr.mxu0 0.0
        %825 = vmatpush2.msra.mxu0 0.0
        %826 = vmatprep.subr.mxu0 0.0
        %827 = vmatpush2.msra.mxu0 0.0
        %828 = vmatprep.subr.mxu0 0.0
        %829 = vmatpush2.msra.mxu0 0.0
        %830 = vmatprep.subr.mxu0 0.0
        %831 = vmatpush2.msra.mxu0 0.0
        %832 = vmatprep.subr.mxu0 0.0
        %833 = vmatpush2.msra.mxu0 0.0
        %834 = vmatprep.subr.mxu0 0.0
        %835 = vmatpush2.msra.mxu0 0.0
        %836 = vmatprep.subr.mxu0 0.0
        %837 = vmatpush2.msra.mxu0 0.0
        %838 = vmatprep.mubr.f32.mxu0 0.0
        %839 = vmatmul.mubr.f32.gmra.mxu0 %v585
        %v840 = vpop.f32.mrf.mxu0
        %v841 = vadd.f32 %v566, %v840
        %v842 = vpop.f32.mrf.mxu0
        %843 = vmatprep.mubr.f32.mxu0 0.0
        %844 = vmatmul.mubr.f32.gmra.mxu0 %v588
        %v845 = vpop.f32.mrf.mxu0
        %v846 = vadd.f32 %v571, %v845
        %v847 = vpop.f32.mrf.mxu0
        %848 = vmatprep.mubr.f32.mxu0 0.0
        %849 = vmatmul.mubr.f32.gmra.mxu0 %v591
        %v850 = vpop.f32.mrf.mxu0
        %v851 = vadd.f32 %v576, %v850
        %v852 = vpop.f32.mrf.mxu0
        %853 = vmatprep.mubr.f32.mxu0 0.0
        %854 = vmatmul.mubr.f32.gmra.mxu0 %v594
        %v855 = vpop.f32.mrf.mxu0
        %v856 = vadd.f32 %v581, %v855
        %v857 = vpop.f32.mrf.mxu0
        %858 = vdwg.mxu0
        %v859 = vtanh.pop %v663
        %v860 = vtanh.pop %v665
        %v861 = vtanh.pop %v752
        %v862 = vtanh.pop %v754
        %v863 = vtanh.pop %v841
        %v864 = vtanh.pop %v669
        %v865 = vtanh.pop %v671
        %v866 = vtanh.pop %v758
        %v867 = vtanh.pop %v760
        %v868 = vtanh.pop %v846
        %v869 = vtanh.pop %v675
        %v870 = vtanh.pop %v677
        %v871 = vtanh.pop %v764
        %v872 = vtanh.pop %v766
        %v873 = vtanh.pop %v851
        %v874 = vtanh.pop %v681
        %v875 = vtanh.pop %v683
        %v876 = vtanh.pop %v770
        %v877 = vtanh.pop %v772
        %v878 = vtanh.pop %v856
        %v879 = vld [vmem:[%s5] sm:$0xff]
        %v880 = vld [vmem:[%s5 + $0x8] sm:$0xff]
        %v881 = vld [vmem:[%s5 + $0x10] sm:$0xff]
        %v882 = vld [vmem:[%s5 + $0x18] sm:$0xff]
        %v883 = vld [vmem:[%s6] sm:$0xff]
        %v884 = vld [vmem:[%s6 + $0x8] sm:$0xff]
        %v885 = vld [vmem:[%s6 + $0x10] sm:$0xff]
        %v886 = vld [vmem:[%s6 + $0x18] sm:$0xff]
        %888 = vset.pattern.permute.xlu0 0
        %889 = vperm.xlu0 %888, %v883
        %v890 = vpop.permute.xlu0 %889
        %893 = vset.pattern.permute.xlu0 0
        %894 = vperm.xlu0 %893, %v884
        %v895 = vpop.permute.xlu0 %894
        %898 = vset.pattern.permute.xlu0 0
        %899 = vperm.xlu0 %898, %v885
        %v900 = vpop.permute.xlu0 %899
        %903 = vset.pattern.permute.xlu0 0
        %904 = vperm.xlu0 %903, %v886
        %v905 = vpop.permute.xlu0 %904
        %v908 = vsel %vm583, %v879, 0
        %v911 = vsel %vm583, %v880, 0
        %v914 = vsel %vm583, %v881, 0
        %v917 = vsel %vm583, %v882, 0
        %919 = vmatprep.subr.mxu0 0.0
        %920 = vmatpush1.msra.mxu0 0.0
        %921 = vmatprep.subr.mxu0 0.0
        %922 = vmatpush1.msra.mxu0 0.0
        %923 = vmatprep.subr.mxu0 0.0
        %924 = vmatpush1.msra.mxu0 0.0
        %925 = vmatprep.subr.mxu0 0.0
        %926 = vmatpush1.msra.mxu0 0.0
        %927 = vmatprep.subr.mxu0 0.0
        %928 = vmatpush1.msra.mxu0 0.0
        %929 = vmatprep.subr.mxu0 0.0
        %930 = vmatpush1.msra.mxu0 0.0
        %931 = vmatprep.subr.mxu0 0.0
        %932 = vmatpush1.msra.mxu0 0.0
        %933 = vmatprep.subr.mxu0 0.0
        %934 = vmatpush1.msra.mxu0 0.0
        %935 = vmatprep.subr.mxu0 0.0
        %936 = vmatpush1.msra.mxu0 0.0
        %937 = vmatprep.subr.mxu0 0.0
        %938 = vmatpush1.msra.mxu0 0.0
        %939 = vmatprep.subr.mxu0 0.0
        %940 = vmatpush1.msra.mxu0 0.0
        %941 = vmatprep.subr.mxu0 0.0
        %942 = vmatpush1.msra.mxu0 0.0
        %943 = vmatprep.subr.mxu0 %v875
        %944 = vmatpush1.msra.mxu0 %v874
        %945 = vmatprep.subr.mxu0 %v870
        %946 = vmatpush1.msra.mxu0 %v869
        %947 = vmatprep.subr.mxu0 %v865
        %948 = vmatpush1.msra.mxu0 %v864
        %949 = vmatprep.subr.mxu0 %v860
        %950 = vmatpush1.msra.mxu0 %v859
        %951 = vmatprep.subr.mxu0 0.0
        %952 = vmatpush2.msra.mxu0 0.0
        %953 = vmatprep.subr.mxu0 0.0
        %954 = vmatpush2.msra.mxu0 0.0
        %955 = vmatprep.subr.mxu0 0.0
        %956 = vmatpush2.msra.mxu0 0.0
        %957 = vmatprep.subr.mxu0 0.0
        %958 = vmatpush2.msra.mxu0 0.0
        %959 = vmatprep.subr.mxu0 0.0
        %960 = vmatpush2.msra.mxu0 0.0
        %961 = vmatprep.subr.mxu0 0.0
        %962 = vmatpush2.msra.mxu0 0.0
        %963 = vmatprep.subr.mxu0 0.0
        %964 = vmatpush2.msra.mxu0 0.0
        %965 = vmatprep.subr.mxu0 0.0
        %966 = vmatpush2.msra.mxu0 0.0
        %967 = vmatprep.subr.mxu0 0.0
        %968 = vmatpush2.msra.mxu0 0.0
        %969 = vmatprep.subr.mxu0 0.0
        %970 = vmatpush2.msra.mxu0 0.0
        %971 = vmatprep.subr.mxu0 0.0
        %972 = vmatpush2.msra.mxu0 0.0
        %973 = vmatprep.subr.mxu0 0.0
        %974 = vmatpush2.msra.mxu0 0.0
        %975 = vmatprep.subr.mxu0 0.0
        %976 = vmatpush2.msra.mxu0 0.0
        %977 = vmatprep.subr.mxu0 0.0
        %978 = vmatpush2.msra.mxu0 0.0
        %979 = vmatprep.subr.mxu0 0.0
        %980 = vmatpush2.msra.mxu0 0.0
        %981 = vmatprep.subr.mxu0 0.0
        %982 = vmatpush2.msra.mxu0 0.0
        %983 = vmatprep.mubr.f32.mxu0 0.0
        %984 = vmatmul.mubr.f32.gmra.mxu0 %v908
        %v985 = vpop.f32.mrf.mxu0
        %v986 = vadd.f32 %v890, %v985
        %v987 = vpop.f32.mrf.mxu0
        %v988 = vadd.f32 %v890, %v987
        %989 = vmatprep.mubr.f32.mxu0 0.0
        %990 = vmatmul.mubr.f32.gmra.mxu0 %v911
        %v991 = vpop.f32.mrf.mxu0
        %v992 = vadd.f32 %v895, %v991
        %v993 = vpop.f32.mrf.mxu0
        %v994 = vadd.f32 %v895, %v993
        %995 = vmatprep.mubr.f32.mxu0 0.0
        %996 = vmatmul.mubr.f32.gmra.mxu0 %v914
        %v997 = vpop.f32.mrf.mxu0
        %v998 = vadd.f32 %v900, %v997
        %v999 = vpop.f32.mrf.mxu0
        %v1000 = vadd.f32 %v900, %v999
        %1001 = vmatprep.mubr.f32.mxu0 0.0
        %1002 = vmatmul.mubr.f32.gmra.mxu0 %v917
        %v1003 = vpop.f32.mrf.mxu0
        %v1004 = vadd.f32 %v905, %v1003
        %v1005 = vpop.f32.mrf.mxu0
        %v1006 = vadd.f32 %v905, %v1005
        %1007 = vdwg.mxu0
        %1008 = vmatprep.subr.mxu0 0.0
        %1009 = vmatpush1.msra.mxu0 0.0
        %1010 = vmatprep.subr.mxu0 0.0
        %1011 = vmatpush1.msra.mxu0 0.0
        %1012 = vmatprep.subr.mxu0 0.0
        %1013 = vmatpush1.msra.mxu0 0.0
        %1014 = vmatprep.subr.mxu0 0.0
        %1015 = vmatpush1.msra.mxu0 0.0
        %1016 = vmatprep.subr.mxu0 0.0
        %1017 = vmatpush1.msra.mxu0 0.0
        %1018 = vmatprep.subr.mxu0 0.0
        %1019 = vmatpush1.msra.mxu0 0.0
        %1020 = vmatprep.subr.mxu0 0.0
        %1021 = vmatpush1.msra.mxu0 0.0
        %1022 = vmatprep.subr.mxu0 0.0
        %1023 = vmatpush1.msra.mxu0 0.0
        %1024 = vmatprep.subr.mxu0 0.0
        %1025 = vmatpush1.msra.mxu0 0.0
        %1026 = vmatprep.subr.mxu0 0.0
        %1027 = vmatpush1.msra.mxu0 0.0
        %1028 = vmatprep.subr.mxu0 0.0
        %1029 = vmatpush1.msra.mxu0 0.0
        %1030 = vmatprep.subr.mxu0 0.0
        %1031 = vmatpush1.msra.mxu0 0.0
        %1032 = vmatprep.subr.mxu0 %v877
        %1033 = vmatpush1.msra.mxu0 %v876
        %1034 = vmatprep.subr.mxu0 %v872
        %1035 = vmatpush1.msra.mxu0 %v871
        %1036 = vmatprep.subr.mxu0 %v867
        %1037 = vmatpush1.msra.mxu0 %v866
        %1038 = vmatprep.subr.mxu0 %v862
        %1039 = vmatpush1.msra.mxu0 %v861
        %1040 = vmatprep.subr.mxu0 0.0
        %1041 = vmatpush2.msra.mxu0 0.0
        %1042 = vmatprep.subr.mxu0 0.0
        %1043 = vmatpush2.msra.mxu0 0.0
        %1044 = vmatprep.subr.mxu0 0.0
        %1045 = vmatpush2.msra.mxu0 0.0
        %1046 = vmatprep.subr.mxu0 0.0
        %1047 = vmatpush2.msra.mxu0 0.0
        %1048 = vmatprep.subr.mxu0 0.0
        %1049 = vmatpush2.msra.mxu0 0.0
        %1050 = vmatprep.subr.mxu0 0.0
        %1051 = vmatpush2.msra.mxu0 0.0
        %1052 = vmatprep.subr.mxu0 0.0
        %1053 = vmatpush2.msra.mxu0 0.0
        %1054 = vmatprep.subr.mxu0 0.0
        %1055 = vmatpush2.msra.mxu0 0.0
        %1056 = vmatprep.subr.mxu0 0.0
        %1057 = vmatpush2.msra.mxu0 0.0
        %1058 = vmatprep.subr.mxu0 0.0
        %1059 = vmatpush2.msra.mxu0 0.0
        %1060 = vmatprep.subr.mxu0 0.0
        %1061 = vmatpush2.msra.mxu0 0.0
        %1062 = vmatprep.subr.mxu0 0.0
        %1063 = vmatpush2.msra.mxu0 0.0
        %1064 = vmatprep.subr.mxu0 0.0
        %1065 = vmatpush2.msra.mxu0 0.0
        %1066 = vmatprep.subr.mxu0 0.0
        %1067 = vmatpush2.msra.mxu0 0.0
        %1068 = vmatprep.subr.mxu0 0.0
        %1069 = vmatpush2.msra.mxu0 0.0
        %1070 = vmatprep.subr.mxu0 0.0
        %1071 = vmatpush2.msra.mxu0 0.0
        %1072 = vmatprep.mubr.f32.mxu0 0.0
        %1073 = vmatmul.mubr.f32.gmra.mxu0 %v908
        %v1074 = vpop.f32.mrf.mxu0
        %v1075 = vadd.f32 %v890, %v1074
        %v1076 = vpop.f32.mrf.mxu0
        %v1077 = vadd.f32 %v890, %v1076
        %1078 = vmatprep.mubr.f32.mxu0 0.0
        %1079 = vmatmul.mubr.f32.gmra.mxu0 %v911
        %v1080 = vpop.f32.mrf.mxu0
        %v1081 = vadd.f32 %v895, %v1080
        %v1082 = vpop.f32.mrf.mxu0
        %v1083 = vadd.f32 %v895, %v1082
        %1084 = vmatprep.mubr.f32.mxu0 0.0
        %1085 = vmatmul.mubr.f32.gmra.mxu0 %v914
        %v1086 = vpop.f32.mrf.mxu0
        %v1087 = vadd.f32 %v900, %v1086
        %v1088 = vpop.f32.mrf.mxu0
        %v1089 = vadd.f32 %v900, %v1088
        %1090 = vmatprep.mubr.f32.mxu0 0.0
        %1091 = vmatmul.mubr.f32.gmra.mxu0 %v917
        %v1092 = vpop.f32.mrf.mxu0
        %v1093 = vadd.f32 %v905, %v1092
        %v1094 = vpop.f32.mrf.mxu0
        %v1095 = vadd.f32 %v905, %v1094
        %1096 = vdwg.mxu0
        %1097 = vmatprep.subr.mxu0 0.0
        %1098 = vmatpush1.msra.mxu0 0.0
        %1099 = vmatprep.subr.mxu0 0.0
        %1100 = vmatpush1.msra.mxu0 0.0
        %1101 = vmatprep.subr.mxu0 0.0
        %1102 = vmatpush1.msra.mxu0 0.0
        %1103 = vmatprep.subr.mxu0 0.0
        %1104 = vmatpush1.msra.mxu0 0.0
        %1105 = vmatprep.subr.mxu0 0.0
        %1106 = vmatpush1.msra.mxu0 0.0
        %1107 = vmatprep.subr.mxu0 0.0
        %1108 = vmatpush1.msra.mxu0 0.0
        %1109 = vmatprep.subr.mxu0 0.0
        %1110 = vmatpush1.msra.mxu0 0.0
        %1111 = vmatprep.subr.mxu0 0.0
        %1112 = vmatpush1.msra.mxu0 0.0
        %1113 = vmatprep.subr.mxu0 0.0
        %1114 = vmatpush1.msra.mxu0 0.0
        %1115 = vmatprep.subr.mxu0 0.0
        %1116 = vmatpush1.msra.mxu0 0.0
        %1117 = vmatprep.subr.mxu0 0.0
        %1118 = vmatpush1.msra.mxu0 0.0
        %1119 = vmatprep.subr.mxu0 0.0
        %1120 = vmatpush1.msra.mxu0 0.0
        %1121 = vmatprep.subr.mxu0 0.0
        %1122 = vmatpush1.msra.mxu0 %v878
        %1123 = vmatprep.subr.mxu0 0.0
        %1124 = vmatpush1.msra.mxu0 %v873
        %1125 = vmatprep.subr.mxu0 0.0
        %1126 = vmatpush1.msra.mxu0 %v868
        %1127 = vmatprep.subr.mxu0 0.0
        %1128 = vmatpush1.msra.mxu0 %v863
        %1129 = vmatprep.subr.mxu0 0.0
        %1130 = vmatpush2.msra.mxu0 0.0
        %1131 = vmatprep.subr.mxu0 0.0
        %1132 = vmatpush2.msra.mxu0 0.0
        %1133 = vmatprep.subr.mxu0 0.0
        %1134 = vmatpush2.msra.mxu0 0.0
        %1135 = vmatprep.subr.mxu0 0.0
        %1136 = vmatpush2.msra.mxu0 0.0
        %1137 = vmatprep.subr.mxu0 0.0
        %1138 = vmatpush2.msra.mxu0 0.0
        %1139 = vmatprep.subr.mxu0 0.0
        %1140 = vmatpush2.msra.mxu0 0.0
        %1141 = vmatprep.subr.mxu0 0.0
        %1142 = vmatpush2.msra.mxu0 0.0
        %1143 = vmatprep.subr.mxu0 0.0
        %1144 = vmatpush2.msra.mxu0 0.0
        %1145 = vmatprep.subr.mxu0 0.0
        %1146 = vmatpush2.msra.mxu0 0.0
        %1147 = vmatprep.subr.mxu0 0.0
        %1148 = vmatpush2.msra.mxu0 0.0
        %1149 = vmatprep.subr.mxu0 0.0
        %1150 = vmatpush2.msra.mxu0 0.0
        %1151 = vmatprep.subr.mxu0 0.0
        %1152 = vmatpush2.msra.mxu0 0.0
        %1153 = vmatprep.subr.mxu0 0.0
        %1154 = vmatpush2.msra.mxu0 0.0
        %1155 = vmatprep.subr.mxu0 0.0
        %1156 = vmatpush2.msra.mxu0 0.0
        %1157 = vmatprep.subr.mxu0 0.0
        %1158 = vmatpush2.msra.mxu0 0.0
        %1159 = vmatprep.subr.mxu0 0.0
        %1160 = vmatpush2.msra.mxu0 0.0
        %1161 = vmatprep.mubr.f32.mxu0 0.0
        %1162 = vmatmul.mubr.f32.gmra.mxu0 %v908
        %v1163 = vpop.f32.mrf.mxu0
        %v1164 = vadd.f32 %v890, %v1163
        %v1165 = vpop.f32.mrf.mxu0
        %1166 = vmatprep.mubr.f32.mxu0 0.0
        %1167 = vmatmul.mubr.f32.gmra.mxu0 %v911
        %v1168 = vpop.f32.mrf.mxu0
        %v1169 = vadd.f32 %v895, %v1168
        %v1170 = vpop.f32.mrf.mxu0
        %1171 = vmatprep.mubr.f32.mxu0 0.0
        %1172 = vmatmul.mubr.f32.gmra.mxu0 %v914
        %v1173 = vpop.f32.mrf.mxu0
        %v1174 = vadd.f32 %v900, %v1173
        %v1175 = vpop.f32.mrf.mxu0
        %1176 = vmatprep.mubr.f32.mxu0 0.0
        %1177 = vmatmul.mubr.f32.gmra.mxu0 %v917
        %v1178 = vpop.f32.mrf.mxu0
        %v1179 = vadd.f32 %v905, %v1178
        %v1180 = vpop.f32.mrf.mxu0
        %1181 = vdwg.mxu0
        %v1182 = vtanh.pop %v986
        %v1183 = vtanh.pop %v988
        %v1184 = vtanh.pop %v1075
        %v1185 = vtanh.pop %v1077
        %v1186 = vtanh.pop %v1164
        %v1187 = vtanh.pop %v992
        %v1188 = vtanh.pop %v994
        %v1189 = vtanh.pop %v1081
        %v1190 = vtanh.pop %v1083
        %v1191 = vtanh.pop %v1169
        %v1192 = vtanh.pop %v998
        %v1193 = vtanh.pop %v1000
        %v1194 = vtanh.pop %v1087
        %v1195 = vtanh.pop %v1089
        %v1196 = vtanh.pop %v1174
        %v1197 = vtanh.pop %v1004
        %v1198 = vtanh.pop %v1006
        %v1199 = vtanh.pop %v1093
        %v1200 = vtanh.pop %v1095
        %v1201 = vtanh.pop %v1179
        %v1202 = vld [vmem:[%s7] sm:$0xff]
        %v1203 = vld [vmem:[%s7 + $0x8] sm:$0xff]
        %v1204 = vld [vmem:[%s7 + $0x10] sm:$0xff]
        %v1205 = vld [vmem:[%s7 + $0x18] sm:$0xff]
        %v1206 = vld [vmem:[#allocation2] sm:$0x1]
        %1208 = vset.pattern.permute.xlu0 0
        %1209 = vperm.xlu0 %1208, %v1202
        %v1210 = vpop.permute.xlu0 %1209
        %1213 = vset.pattern.permute.xlu0 0
        %1214 = vperm.xlu0 %1213, %v1203
        %v1215 = vpop.permute.xlu0 %1214
        %1218 = vset.pattern.permute.xlu0 0
        %1219 = vperm.xlu0 %1218, %v1204
        %v1220 = vpop.permute.xlu0 %1219
        %1223 = vset.pattern.permute.xlu0 0
        %1224 = vperm.xlu0 %1223, %v1205
        %v1225 = vpop.permute.xlu0 %1224
        %v1227 = vmul.f32 %v1210, %v1182
        %v1228 = vmul.f32 %v1210, %v1183
        %v1229 = vmul.f32 %v1210, %v1184
        %v1230 = vmul.f32 %v1210, %v1185
        %v1231 = vmul.f32 %v1210, %v1186
        %v1232 = vmul.f32 %v1215, %v1187
        %v1233 = vmul.f32 %v1215, %v1188
        %v1234 = vmul.f32 %v1215, %v1189
        %v1235 = vmul.f32 %v1215, %v1190
        %v1236 = vmul.f32 %v1215, %v1191
        %v1237 = vmul.f32 %v1220, %v1192
        %v1238 = vmul.f32 %v1220, %v1193
        %v1239 = vmul.f32 %v1220, %v1194
        %v1240 = vmul.f32 %v1220, %v1195
        %v1241 = vmul.f32 %v1220, %v1196
        %v1242 = vmul.f32 %v1225, %v1197
        %v1243 = vmul.f32 %v1225, %v1198
        %v1244 = vmul.f32 %v1225, %v1199
        %v1245 = vmul.f32 %v1225, %v1200
        %v1246 = vmul.f32 %v1225, %v1201
        %v1247 = vadd.f32 %v1227, %v1232
        %v1248 = vadd.f32 %v1247, %v1237
        %v1249 = vadd.f32 %v1248, %v1242
        %v1250 = vrot.slane %v1249, 4
        %v1251 = vadd.f32 %v1249, %v1250
        %v1252 = vrot.slane %v1251, 2
        %v1253 = vadd.f32 %v1251, %v1252
        %v1254 = vrot.slane %v1253, 1
        %v1255 = vadd.f32 %v1253, %v1254
        %v1256 = vadd.f32 %v1228, %v1233
        %v1257 = vadd.f32 %v1256, %v1238
        %v1258 = vadd.f32 %v1257, %v1243
        %v1259 = vrot.slane %v1258, 4
        %v1260 = vadd.f32 %v1258, %v1259
        %v1261 = vrot.slane %v1260, 2
        %v1262 = vadd.f32 %v1260, %v1261
        %v1263 = vrot.slane %v1262, 1
        %v1264 = vadd.f32 %v1262, %v1263
        %v1265 = vadd.f32 %v1229, %v1234
        %v1266 = vadd.f32 %v1265, %v1239
        %v1267 = vadd.f32 %v1266, %v1244
        %v1268 = vrot.slane %v1267, 4
        %v1269 = vadd.f32 %v1267, %v1268
        %v1270 = vrot.slane %v1269, 2
        %v1271 = vadd.f32 %v1269, %v1270
        %v1272 = vrot.slane %v1271, 1
        %v1273 = vadd.f32 %v1271, %v1272
        %v1274 = vadd.f32 %v1230, %v1235
        %v1275 = vadd.f32 %v1274, %v1240
        %v1276 = vadd.f32 %v1275, %v1245
        %v1277 = vrot.slane %v1276, 4
        %v1278 = vadd.f32 %v1276, %v1277
        %v1279 = vrot.slane %v1278, 2
        %v1280 = vadd.f32 %v1278, %v1279
        %v1281 = vrot.slane %v1280, 1
        %v1282 = vadd.f32 %v1280, %v1281
        %v1283 = vadd.f32 %v1231, %v1236
        %v1284 = vadd.f32 %v1283, %v1241
        %v1285 = vadd.f32 %v1284, %v1246
        %v1286 = vrot.slane %v1285, 4
        %v1287 = vadd.f32 %v1285, %v1286
        %v1288 = vrot.slane %v1287, 2
        %v1289 = vadd.f32 %v1287, %v1288
        %v1290 = vrot.slane %v1289, 1
        %v1291 = vadd.f32 %v1289, %v1290
        %1293 = vset.pattern.permute.xlu0 0
        %1294 = vperm.xlu0 %1293, %v1206
        %v1295 = vpop.permute.xlu0 %1294
        %v1297 = vlaneseq
        %v1298 = vshrl.u32 %v1297, 7
        %v1299 = vsub.s32 0, %v1298
        %v1300 = vrot.slane %v1295, %v1299
        %v1301 = vadd.f32 %v1255, %v1300
        %v1302 = vadd.f32 %v1264, %v1300
        %v1303 = vadd.f32 %v1273, %v1300
        %v1304 = vadd.f32 %v1282, %v1300
        %v1305 = vadd.f32 %v1291, %v1300
        %v1311 = vcombine.low %v1301, %v1302
        %v1312 = vcombine.low %v1303, %v1304
        %v1314 = vunpack.c.l.s4 1966171168
        %v1315 = vunpack.c.0.s8 %v1314
        %v1316 = vlaneseq
        %v1317 = vshrl.u32 %v1316, 7
        %v1318 = vsub.s32 %v1315, %v1317
        %v1319 = vrot.slane %v1311, %v1318
        %v1321 = vunpack.c.l.s4 1966171168
        %v1322 = vunpack.c.0.s8 %v1321
        %v1323 = vlaneseq
        %v1324 = vshrl.u32 %v1323, 7
        %v1325 = vsub.s32 %v1322, %v1324
        %v1326 = vrot.slane %v1312, %v1325
        %v1328 = vunpack.c.l.s4 1966171168
        %v1329 = vunpack.c.0.s8 %v1328
        %v1330 = vlaneseq
        %v1331 = vshrl.u32 %v1330, 7
        %v1332 = vsub.s32 %v1329, %v1331
        %v1333 = vrot.slane %v1305, %v1332
        %v1334 = vcombine.low %v1319, %v1326
        %v1336 = vunpack.c.l.s4 1966171168
        %v1337 = vunpack.c.0.s8 %v1336
        %v1338 = vlaneseq
        %v1339 = vshrl.u32 %v1338, 7
        %v1340 = vsub.s32 %v1337, %v1339
        %v1341 = vrot.slane %v1334, %v1340
        %v1343 = vunpack.c.l.s4 1966171168
        %v1344 = vunpack.c.0.s8 %v1343
        %v1345 = vlaneseq
        %v1346 = vshrl.u32 %v1345, 7
        %v1347 = vsub.s32 %v1344, %v1346
        %v1348 = vrot.slane %v1333, %v1347
        %v1349 = vcombine.low %v1341, %v1348
        %v1351 = vlaneseq
        %vm1352 = vcmp.ge.s32.totalorder %v1351, 0
        %vm1353 = vcmp.lt.s32.totalorder %v1351, 640
        %vm1354 = vmand %vm1352, %vm1353
        %1355 = vst.msk [vmem:[%s328] sm:$0x1f] %vm1354, %v1349
        %s1356 = sand.u32 %s227, 1
        %s1357 = scalar_lea.sflag [#allocation4], %s1356
        %s1358 = sand.u32 %s227, 1
        %s1359 = smul.addr %s1358, 5
        %s1360 = scalar_lea.vmem [#allocation3], %s1359
        // Predicated region
        $region57: #{pinn_forward.1} parent=55 // pred_check
          %p1361 = pneg %p237
        $region58: #{pinn_forward.1} parent=55 // pred_check_branch
          %1363 = sbr.rel (%p1361) target = $region60
        $region59: #{pinn_forward.1} parent=55 // pred_region
          %s1364 = smul.u32 5, %s25
          %s1366 = ssub.s32 80, 80
          %1367 = vsyncadd %s1357, %s1366
          %s1368 = smul.addr %s1364, 16
          %s1369 = scalar_lea.hbm %s9, %s1368
          %s1371 = sshll.u32 %s1360, 4
          %s1372 = int_to_ptr.vmem [resolvable:$true] %s1371
          %1374 = dma.vmem_to_hbm [thread:$0]  %s1372, 80, %s1369, %s1357
        $region60: #{pinn_forward.1} parent=55 // pred_fallthru
          _
      $region56: #{pinn_forward.1} parent=5 // pred_fallthru
        _
      %p1375 = scmp.le.s32.totalorder 2, %s20
      // Predicated region
      $region61: #{pinn_forward.1} parent=5 // pred_check
        %p1376 = pneg %p1375
      $region62: #{pinn_forward.1} parent=5 // pred_check_branch
        %1378 = sbr.rel (%p1376) target = $region64
      $region63: #{pinn_forward.1} parent=5 // pred_region
        %s1379 = ssub.s32 %s20, 2
        // Predicated region
        $region65: #{pinn_forward.1} parent=63 // pred_check
          %p1380 = pneg %p243
        $region66: #{pinn_forward.1} parent=63 // pred_check_branch
          %1382 = sbr.rel (%p1380) target = $region68
        $region67: #{pinn_forward.1} parent=63 // pred_region
          %s1383 = sand.u32 %s228, 1
          %s1384 = scalar_lea.sflag [#allocation4], %s1383
          %s1385 = sand.u32 %s228, 1
          %s1386 = smul.addr %s1385, 5
          %s1387 = scalar_lea.vmem [#allocation3], %s1386
          %1388 = dma.done %s1384, 80
        $region68: #{pinn_forward.1} parent=63 // pred_fallthru
          _
      $region64: #{pinn_forward.1} parent=5 // pred_fallthru
        _
    $region6: #{pinn_forward.1} parent=1 // loop_footer
      %s24 = sadd.s32 1, %s20
    $region7: #{pinn_forward.1} parent=1 // loop_footer_branch
      %19 = sbr.rel target = $region3
    $region8: #{pinn_forward.1} parent=1 // loop_exit
      _
    %1389 = vsyncpa [#allocation4], 1
    %s1390 = scalar_lea.sflag [#allocation4], 1
    %1391 = vsyncpa %s1390, 1

</llo_original>
